<compile_context>
chip_gen: v7x
topology: tpu7x:2x2x1
jax: 0.10.0
libtpu: 0.0.40
codegen_flags: <defaults>
</compile_context>

<pallas_src>
import math
import functools

import jax
import jax.numpy as jnp
from jax import lax
from jax.experimental import pallas as pl
from jax.experimental.pallas import tpu as pltpu

LANES = 128        # lane-dense channel padding
EDGE_BLOCK = 128   # edges per grid step
NODE_TILE = 128    # nodes per grid step


def _round_up(n, m):
    return ((n + m - 1) // m) * m


def _pad2(a, rows, cols):
    r, c = a.shape
    return jnp.pad(a, ((0, rows - r), (0, cols - c)))


# ----------------------------------------------------------------------------
# Kernel: stacked embedding  relu(em([x; z]))
# ----------------------------------------------------------------------------
def _linear_relu_kernel(a_ref, w_ref, b_ref, o_ref):
    y = jnp.dot(a_ref[...], w_ref[...], preferred_element_type=jnp.float32)
    o_ref[...] = jnp.maximum(y + b_ref[...], 0.0)


def pallas_embed(a, w, b, tm=512):
    M, K = a.shape
    N = w.shape[1]
    TM = min(tm, M)
    Mp = _round_up(M, TM)
    if Mp != M:
        a = jnp.pad(a, ((0, Mp - M), (0, 0)))
    out = pl.pallas_call(
        _linear_relu_kernel,
        out_shape=jax.ShapeDtypeStruct((Mp, N), jnp.float32),
        grid=(Mp // TM,),
        in_specs=[pl.BlockSpec((TM, K), lambda i: (i, 0)),
                  pl.BlockSpec((K, N), lambda i: (0, 0)),
                  pl.BlockSpec((1, N), lambda i: (0, 0))],
        out_specs=pl.BlockSpec((TM, N), lambda i: (i, 0)),
        compiler_params=pltpu.CompilerParams(dimension_semantics=("parallel",)),
    )(a, w, b)
    return out[:M]


# ----------------------------------------------------------------------------
# Kernel: per-layer node precompute  sc = x@sc_w + z@scz_w ; h2 = x@(lin1@msg)
# (parallel over node tiles -> both TensorCores on v7x)
# ----------------------------------------------------------------------------
def _node_pre_kernel(x_ref, z_ref, wpack_ref, scz_ref, sc_ref, h2_ref):
    t = jnp.dot(x_ref[...], wpack_ref[...], preferred_element_type=jnp.float32)
    sc_ref[...] = t[:, :LANES] + jnp.dot(z_ref[...], scz_ref[...],
                                         preferred_element_type=jnp.float32)
    h2_ref[...] = t[:, LANES:]


def pallas_node_pre(x, z, wpack, scz, tm=NODE_TILE):
    Np = x.shape[0]
    return pl.pallas_call(
        _node_pre_kernel,
        out_shape=(jax.ShapeDtypeStruct((Np, LANES), jnp.float32),
                   jax.ShapeDtypeStruct((Np, LANES), jnp.float32)),
        grid=(Np // tm,),
        in_specs=[pl.BlockSpec((tm, LANES), lambda i: (i, 0)),
                  pl.BlockSpec((tm, LANES), lambda i: (i, 0)),
                  pl.BlockSpec((LANES, 2 * LANES), lambda i: (0, 0)),
                  pl.BlockSpec((LANES, LANES), lambda i: (0, 0))],
        out_specs=(pl.BlockSpec((tm, LANES), lambda i: (i, 0)),
                   pl.BlockSpec((tm, LANES), lambda i: (i, 0))),
        compiler_params=pltpu.CompilerParams(dimension_semantics=("parallel",)),
    )(x, z, wpack, scz)


# ----------------------------------------------------------------------------
# Kernel: radially-weighted messages + scatter-add over destination nodes
# (serial "arbitrary" grid over edge blocks, output accumulator stays in VMEM)
# ----------------------------------------------------------------------------
def _message_scatter_kernel(max_radius, num_basis, src_ref, dst_ref, len_ref,
                            h2_ref, r1_ref, r1b_ref, r2_ref, agg_ref):
    eb = pl.program_id(0)

    @pl.when(eb == 0)
    def _init():
        agg_ref[...] = jnp.zeros_like(agg_ref)

    r = len_ref[...]                                           # (TE, 1) lengths
    # e3nn smooth_cutoff(r / max_radius)
    u = 2.0 * (r * (1.0 / max_radius) - 1.0)
    cut = 0.5 * (1.0 - jnp.cos(jnp.float32(math.pi) * u))
    cut = jnp.where(u > 0.0, 0.0, cut)
    cut = jnp.where(u < -1.0, 1.0, cut)
    # e3nn soft_one_hot_linspace(basis='gaussian', cutoff=False) * sqrt(n_basis)
    # (the /1.12 constant is e3nn's gaussian-basis normalization)
    step = max_radius / (num_basis - 1)
    te = r.shape[0]
    lane = lax.broadcasted_iota(jnp.int32, (te, LANES), 1)
    diff = (r - lane.astype(jnp.float32) * step) * (1.0 / step)
    emb = jnp.exp(-diff * diff) * ((num_basis ** 0.5) / 1.12)
    emb = jnp.where(lane < num_basis, emb, 0.0)                # (TE, 128)

    # radial MLP (silu hidden) -> per-channel edge weights, cutoff folded in
    rw = jnp.dot(emb, r1_ref[...], preferred_element_type=jnp.float32)
    rw = rw + r1b_ref[...]
    rw = rw * (1.0 / (1.0 + jnp.exp(-rw)))                     # silu
    w_e = jnp.dot(rw, r2_ref[...], preferred_element_type=jnp.float32) * cut

    # gather (one-hot matmul) -> batched message multiply -> scatter (matmul)
    n_nodes = h2_ref.shape[0]
    node_ids = lax.broadcasted_iota(jnp.int32, (te, n_nodes), 1)
    oh_src = (node_ids == src_ref[...]).astype(jnp.float32)    # (TE, Np)
    oh_dst = (node_ids == dst_ref[...]).astype(jnp.float32)
    msg = jnp.dot(oh_src, h2_ref[...], preferred_element_type=jnp.float32) * w_e
    agg_ref[...] += jnp.dot(oh_dst.T, msg, preferred_element_type=jnp.float32)


def pallas_message_scatter(src_col, dst_col, elen_col, h2, r1, r1b, r2,
                           max_radius, num_basis):
    Ep = src_col.shape[0]
    Np = h2.shape[0]
    kern = functools.partial(_message_scatter_kernel, max_radius, num_basis)
    return pl.pallas_call(
        kern,
        out_shape=jax.ShapeDtypeStruct((Np, LANES), jnp.float32),
        grid=(Ep // EDGE_BLOCK,),
        in_specs=[pl.BlockSpec((EDGE_BLOCK, 1), lambda e: (e, 0)),      # src
                  pl.BlockSpec((EDGE_BLOCK, 1), lambda e: (e, 0)),      # dst
                  pl.BlockSpec((EDGE_BLOCK, 1), lambda e: (e, 0)),      # length
                  pl.BlockSpec((Np, LANES), lambda e: (0, 0)),          # h2 (resident)
                  pl.BlockSpec((LANES, LANES), lambda e: (0, 0)),       # r1_w
                  pl.BlockSpec((1, LANES), lambda e: (0, 0)),           # r1_b
                  pl.BlockSpec((LANES, LANES), lambda e: (0, 0))],      # r2_w
        out_specs=pl.BlockSpec((Np, LANES), lambda e: (0, 0)),          # accumulator
        compiler_params=pltpu.CompilerParams(
            dimension_semantics=("arbitrary",),
            vmem_limit_bytes=32 * 1024 * 1024),
    )(src_col, dst_col, elen_col, h2, r1, r1b, r2)


# ----------------------------------------------------------------------------
# Kernel: per-layer node finalize  y = gate(lin2(agg / sqrt(nn)) + sc)
# ----------------------------------------------------------------------------
def _node_post_kernel(act, inv_sqrt_nn, agg_ref, sc_ref, lin2_ref, out_ref):
    y = jnp.dot(agg_ref[...] * jnp.float32(inv_sqrt_nn), lin2_ref[...],
                preferred_element_type=jnp.float32) + sc_ref[...]
    if act == "silu":
        y = y * (1.0 / (1.0 + jnp.exp(-y)))
    out_ref[...] = y


def pallas_node_post(agg, sc, lin2, act, num_neighbors, tm=NODE_TILE):
    Np = agg.shape[0]
    kern = functools.partial(_node_post_kernel, act,
                             1.0 / math.sqrt(num_neighbors))
    return pl.pallas_call(
        kern,
        out_shape=jax.ShapeDtypeStruct((Np, LANES), jnp.float32),
        grid=(Np // tm,),
        in_specs=[pl.BlockSpec((tm, LANES), lambda i: (i, 0)),
                  pl.BlockSpec((tm, LANES), lambda i: (i, 0)),
                  pl.BlockSpec((LANES, LANES), lambda i: (0, 0))],
        out_specs=pl.BlockSpec((tm, LANES), lambda i: (i, 0)),
        compiler_params=pltpu.CompilerParams(dimension_semantics=("parallel",)),
    )(agg, sc, lin2)


def pallas_conv_layer(x, z, elen_col, src_col, dst_col, lw, act,
                      num_neighbors, max_radius, num_basis):
    sc, h2 = pallas_node_pre(x, z, lw["wpack"], lw["scz"])
    agg = pallas_message_scatter(src_col, dst_col, elen_col, h2,
                                 lw["r1"], lw["r1b"], lw["r2"],
                                 max_radius, num_basis)
    return pallas_node_post(agg, sc, lw["lin2"], act, num_neighbors)


# ----------------------------------------------------------------------------
# Kernel: final ReLU + scatter-mean pool (one-hot matmul) + row-max normalize
# ----------------------------------------------------------------------------
def _pool_norm_kernel(batch_ref, x_ref, invcnt_ref, out_ref, acc):
    nb = pl.program_id(0)

    @pl.when(nb == 0)
    def _init():
        acc[...] = jnp.zeros_like(acc)

    xr = jnp.maximum(x_ref[...], 0.0)                     # output = relu(output)
    n_block = xr.shape[0]
    n_graphs = acc.shape[0]
    gid = lax.broadcasted_iota(jnp.int32, (n_block, n_graphs), 1)
    oh = (gid == batch_ref[...]).astype(jnp.float32)      # (NB, Gp)
    acc[...] += jnp.dot(oh.T, xr, preferred_element_type=jnp.float32)

    @pl.when(nb == pl.num_programs(0) - 1)
    def _final():
        pooled = acc[...] * invcnt_ref[...]               # scatter_mean
        m = jnp.max(pooled, axis=-1, keepdims=True)       # row max (pads are 0)
        m = jnp.maximum(m, 1e-12)                         # guard all-zero rows
        out_ref[...] = pooled / m                         # exact divide


def pallas_pool_norm(x, batch_col, inv_counts, tm=NODE_TILE):
    Np = x.shape[0]
    Gp = inv_counts.shape[0]
    return pl.pallas_call(
        _pool_norm_kernel,
        out_shape=jax.ShapeDtypeStruct((Gp, LANES), jnp.float32),
        grid=(Np // tm,),
        in_specs=[pl.BlockSpec((tm, 1), lambda n: (n, 0)),
                  pl.BlockSpec((tm, LANES), lambda n: (n, 0)),
                  pl.BlockSpec((Gp, LANES), lambda n: (0, 0))],
        out_specs=pl.BlockSpec((Gp, LANES), lambda n: (0, 0)),
        scratch_shapes=[pltpu.VMEM((Gp, LANES), jnp.float32)],
        compiler_params=pltpu.CompilerParams(
            dimension_semantics=("arbitrary",),
            vmem_limit_bytes=32 * 1024 * 1024),
    )(batch_col, x, inv_counts)


# ----------------------------------------------------------------------------
# Parameters (deterministic, synthetic) and padding / packing for the kernels
# ----------------------------------------------------------------------------
def init_params(key, in_dim, em_dim, hidden, out_dim, num_basis, radial_neurons):
    ks = jax.random.split(key, 16)

    def w(k, shape):
        return jax.random.normal(k, shape, jnp.float32) / math.sqrt(shape[0])

    p = {"em_w": w(ks[0], (in_dim, em_dim)),
         "em_b": jnp.zeros((1, em_dim), jnp.float32)}
    p["l0"] = dict(
        sc_w=w(ks[1], (em_dim, hidden)), scz_w=w(ks[2], (em_dim, hidden)),
        lin1_w=w(ks[3], (em_dim, em_dim)),
        r1_w=w(ks[4], (num_basis, radial_neurons)),
        r1_b=jnp.zeros((1, radial_neurons), jnp.float32),
        r2_w=w(ks[5], (radial_neurons, hidden)),
        msg_w=w(ks[6], (em_dim, hidden)),
        lin2_w=w(ks[7], (hidden, hidden)),
    )
    p["lf"] = dict(
        sc_w=w(ks[8], (hidden, out_dim)), scz_w=w(ks[9], (em_dim, out_dim)),
        lin1_w=w(ks[10], (hidden, hidden)),
        r1_w=w(ks[11], (num_basis, radial_neurons)),
        r1_b=jnp.zeros((1, radial_neurons), jnp.float32),
        r2_w=w(ks[12], (radial_neurons, out_dim)),
        msg_w=w(ks[13], (hidden, out_dim)),
        lin2_w=w(ks[14], (out_dim, out_dim)),
    )
    return p


def _prepare_layer(pp):
    # fold lin1 @ msg on the host so node precompute is a single wide matmul;
    # zero-pad every weight to 128 lanes.
    h2_w = pp["lin1_w"] @ pp["msg_w"]
    wpack = jnp.concatenate([_pad2(pp["sc_w"], LANES, LANES),
                             _pad2(h2_w, LANES, LANES)], axis=1)    # (128, 256)
    return dict(wpack=wpack,
                scz=_pad2(pp["scz_w"], LANES, LANES),
                r1=_pad2(pp["r1_w"], LANES, LANES),
                r1b=_pad2(pp["r1_b"], 1, LANES),
                r2=_pad2(pp["r2_w"], LANES, LANES),
                lin2=_pad2(pp["lin2_w"], LANES, LANES))


# ----------------------------------------------------------------------------
# Forward pass
# ----------------------------------------------------------------------------
def periodic_network_forward(params, data, max_radius, num_basis, num_neighbors):
    x_in, z_in, pos = data["x"], data["z"], data["pos"]
    edge_src, edge_dst, batch = data["edge_src"], data["edge_dst"], data["batch"]
    N = x_in.shape[0]
    E = edge_src.shape[0]
    G = int(batch.max()) + 1
    out_dim = params["lf"]["lin2_w"].shape[1]

    Np = _round_up(N, NODE_TILE)
    Ep = _round_up(E, EDGE_BLOCK)
    Gp = _round_up(G + 1, LANES)          # +1: dummy graph row for padded nodes

    # ---- host-side glue: edge lengths, index columns, counts ----------------
    edge_vec = pos[edge_src] - pos[edge_dst]                       # (E, 3)
    edge_len = jnp.sqrt(jnp.sum(edge_vec * edge_vec, axis=1))      # (E,)
    # padding edges sit past the cutoff radius -> zero message weight, src=dst=0
    elen_col = jnp.concatenate(
        [edge_len.astype(jnp.float32),
         jnp.full((Ep - E,), 2.0 * max_radius, jnp.float32)])[:, None]
    src_col = jnp.concatenate([edge_src.astype(jnp.int32),
                               jnp.zeros((Ep - E,), jnp.int32)])[:, None]
    dst_col = jnp.concatenate([edge_dst.astype(jnp.int32),
                               jnp.zeros((Ep - E,), jnp.int32)])[:, None]
    # padded nodes are routed to dummy graph id G (later sliced off)
    batch_col = jnp.concatenate([batch.astype(jnp.int32),
                                 jnp.full((Np - N,), G, jnp.int32)])[:, None]
    counts = jnp.zeros((Gp,), jnp.float32).at[batch].add(1.0)
    inv_counts = jnp.where(counts > 0, 1.0 / jnp.maximum(counts, 1.0), 0.0)
    inv_counts = jnp.broadcast_to(inv_counts[:, None], (Gp, LANES))

    x_pad = _pad2(x_in, Np, LANES)
    z_pad = _pad2(z_in, Np, LANES)

    # ---- data.x = relu(em(data.x)); data.z = relu(em(data.z)) (one matmul) ---
    em_w = _pad2(params["em_w"], LANES, LANES)
    em_b = _pad2(params["em_b"], 1, LANES)
    xz = pallas_embed(jnp.concatenate([x_pad, z_pad], axis=0), em_w, em_b)
    x, z = xz[:Np], xz[Np:]

    # ---- layers: Convolution+Gate, then final Convolution --------------------
    lw0 = _prepare_layer(params["l0"])
    lwf = _prepare_layer(params["lf"])
    x = pallas_conv_layer(x, z, elen_col, src_col, dst_col, lw0, "silu",
                          num_neighbors, max_radius, num_basis)
    x = pallas_conv_layer(x, z, elen_col, src_col, dst_col, lwf, "none",
                          num_neighbors, max_radius, num_basis)

    # ---- relu + scatter_mean(batch) + divide by per-row max ------------------
    out = pallas_pool_norm(x, batch_col, inv_counts)
    return out[:G, :out_dim]


# ----------------------------------------------------------------------------
if __name__ == "__main__":
    key = jax.random.PRNGKey(0)
    N, E = 8, 16
    in_dim, em_dim, hidden, out_dim = 4, 16, 16, 8
    num_basis, radial_neurons = 10, 16
    max_radius = 4.0

    kx, kz, kp, ks, kd, kw = jax.random.split(key, 6)
    x = jax.random.normal(kx, (N, in_dim), jnp.float32)
    z = jax.random.normal(kz, (N, in_dim), jnp.float32)
    pos = jax.random.normal(kp, (N, 3), jnp.float32) * 1.5
    edge_src = jax.random.randint(ks, (E,), 0, N)
    edge_dst = (edge_src + 1 + jax.random.randint(kd, (E,), 0, N - 1)) % N
    batch = jnp.array([0] * (N // 2) + [1] * (N // 2), dtype=jnp.int32)

    params = init_params(kw, in_dim, em_dim, hidden, out_dim,
                         num_basis, radial_neurons)
    data = dict(x=x, z=z, pos=pos, edge_src=edge_src,
                edge_dst=edge_dst, batch=batch)

    out = periodic_network_forward(params, data, max_radius, num_basis,
                                   num_neighbors=1.0)
    jax.block_until_ready(out)
    G = int(batch.max()) + 1
    assert out.shape == (G, out_dim)
    assert bool(jnp.all(jnp.isfinite(out)))
    print("KERNEL_OK")
</pallas_src>

<mosaic_0001>
module attributes {stable_mosaic.version = 11 : i64} {
  func.func @_linear_relu_kernel(%arg0: i32, %arg1: memref<256x128xf32, #tpu.memory_space<vmem>>, %arg2: memref<128x128xf32, #tpu.memory_space<vmem>>, %arg3: memref<1x128xf32, #tpu.memory_space<vmem>>, %arg4: memref<256x128xf32, #tpu.memory_space<vmem>>) attributes {dimension_semantics = [#tpu.dimension_semantics<parallel>], iteration_bounds = array<i64: 1>, scalar_prefetch = 0 : i64, scratch_operands = 0 : i64, tpu.core_type = #tpu.core_type<tc>, window_params = [{transform_indices = @transform_0, window_bounds = array<i64: 256, 128>}, {pipeline_mode = #tpu.pipeline_mode<synchronous>, transform_indices = @transform_1, window_bounds = array<i64: 128, 128>}, {pipeline_mode = #tpu.pipeline_mode<synchronous>, transform_indices = @transform_2, window_bounds = array<i64: 1, 128>}, {transform_indices = @transform_3, window_bounds = array<i64: 256, 128>}]} {
    %c0 = arith.constant 0 : index
    %c0_0 = arith.constant 0 : index
    %0 = vector.load %arg1[%c0, %c0_0] : memref<256x128xf32, #tpu.memory_space<vmem>>, vector<256x128xf32>
    %c0_1 = arith.constant 0 : index
    %c0_2 = arith.constant 0 : index
    %1 = vector.load %arg2[%c0_1, %c0_2] : memref<128x128xf32, #tpu.memory_space<vmem>>, vector<128x128xf32>
    %cst = arith.constant dense<0.000000e+00> : vector<256x128xf32>
    %2 = tpu.matmul %0, %1, %cst {dimension_numbers = #tpu.dot_dimension_numbers<[1], [0], [0], [1], [0, 0, 1, 1], [], []>} : vector<256x128xf32>, vector<128x128xf32>, vector<256x128xf32> -> vector<256x128xf32>
    %c0_3 = arith.constant 0 : index
    %c0_4 = arith.constant 0 : index
    %3 = vector.load %arg3[%c0_3, %c0_4] : memref<1x128xf32, #tpu.memory_space<vmem>>, vector<1x128xf32>
    %4 = vector.broadcast %3 : vector<1x128xf32> to vector<256x128xf32>
    %5 = arith.addf %2, %4 : vector<256x128xf32>
    %cst_5 = arith.constant 0.000000e+00 : f32
    %6 = vector.broadcast %cst_5 : f32 to vector<256x128xf32>
    %7 = arith.maximumf %5, %6 : vector<256x128xf32>
    %c0_6 = arith.constant 0 : index
    %c0_7 = arith.constant 0 : index
    %8 = vector.load %arg4[%c0_6, %c0_7] : memref<256x128xf32, #tpu.memory_space<vmem>>, vector<256x128xf32>
    tpu.vector_store %arg4[%c0_6, %c0_7], %7 {strides = array<i32>} : memref<256x128xf32, #tpu.memory_space<vmem>>, vector<256x128xf32>,
    return
  }
  func.func @transform_0(%arg0: i32) -> (i32, i32) {
    %c0_i32 = arith.constant 0 : i32
    %c0_i32_0 = arith.constant 0 : i32
    return %arg0, %c0_i32 : i32, i32
  }
  func.func @transform_1(%arg0: i32) -> (i32, i32) {
    %c0_i32 = arith.constant 0 : i32
    %c0_i32_0 = arith.constant 0 : i32
    %c0_i32_1 = arith.constant 0 : i32
    return %c0_i32, %c0_i32_0 : i32, i32
  }
  func.func @transform_2(%arg0: i32) -> (i32, i32) {
    %c0_i32 = arith.constant 0 : i32
    %c0_i32_0 = arith.constant 0 : i32
    %c0_i32_1 = arith.constant 0 : i32
    return %c0_i32, %c0_i32_0 : i32, i32
  }
  func.func @transform_3(%arg0: i32) -> (i32, i32) {
    %c0_i32 = arith.constant 0 : i32
    %c0_i32_0 = arith.constant 0 : i32
    return %arg0, %c0_i32 : i32, i32
  }
}

</mosaic_0001>

<llo_original>
// kernel: tpu_custom_call.1
$region0: #{tpu_custom_call.1}
  #allocation0 [shape = 'u32[]', space=smem, size = 0x4, offset = 0x4, fixed_abs, tag = 'smem constant byte address 0x4 - core index']
  #allocation1 [shape = 'u32[144,128]{1,0:T(1,128)}', space=vmem, size = 0x12000, scoped, tag = 'internal scratch']
  %s0 = inlined_call_operand.hbm [shape: f32[256,128], index: 0, kind: input, shape index: {}]
  %s1 = inlined_call_operand.hbm [shape: f32[128,128], index: 1, kind: input, shape index: {}]
  %s2 = inlined_call_operand.vmem [shape: f32[1,128], index: 2, kind: input, shape index: {}]
  %s3 = inlined_call_operand.hbm [shape: f32[256,128], index: 3, kind: output, shape index: {}]
  %s4 = sld [smem:[#allocation0]]
  $region30: #{tpu_custom_call.1} parent=0
    _
  %s6 = ssub.s32 1, %s4
  %s7 = scalar_select 0, %s6, %s4
  $region1: #{tpu_custom_call.1} parent=0
    #allocation2 [shape = 'u8[131072]{0}', space=vmem, size = 0x20000, scoped, tag = 'input window, operand 0, single buffered']
    #allocation3 [shape = 's32[1]{0}', space=sflag, size = 0x4, scoped, tag = 'scoped memory for tpu_custom_call.1']
    #allocation4 [shape = 's32[1]{0}', space=sflag, size = 0x4, scoped, tag = 'scoped memory for tpu_custom_call.1']
    #allocation5 [shape = 'u8[65536]{0}', space=vmem, size = 0x10000, scoped, tag = 'input window, operand 1, single buffered']
    #allocation6 [shape = 's32[1]{0}', space=sflag, size = 0x4, scoped, tag = 'scoped memory for tpu_custom_call.1']
    #allocation7 [shape = 'u8[131072]{0}', space=vmem, size = 0x20000, scoped, tag = 'output window, operand 0, single buffered']
    %8 = vsyncpa [#allocation3], 0
    %9 = vsyncpa [#allocation6], 0
    %10 = vsyncpa [#allocation4], 0
    // Predicated region
    $region2: #{tpu_custom_call.1} parent=1 // pred_check
      _
    $region3: #{tpu_custom_call.1} parent=1 // pred_check_branch
      %12 = sbr.rel (0) target = $region5
    $region4: #{tpu_custom_call.1} parent=1 // pred_region
      %s14 = ssub.s32 4096, 4096
      %15 = vsyncadd [#allocation3], %s14
      %s16 = sshll.u32 [#allocation2], 4
      %s17 = int_to_ptr.vmem [resolvable:$true] %s16
      %22 = dma.hbm_to_vmem [thread:$0]  %s0, 4096, %s17, [#allocation3], 128, 128, 8
    $region5: #{tpu_custom_call.1} parent=1 // pred_fallthru
      _
    // Predicated region
    $region6: #{tpu_custom_call.1} parent=1 // pred_check
      _
    $region7: #{tpu_custom_call.1} parent=1 // pred_check_branch
      %24 = sbr.rel (0) target = $region9
    $region8: #{tpu_custom_call.1} parent=1 // pred_region
      %s26 = ssub.s32 2048, 2048
      %27 = vsyncadd [#allocation6], %s26
      %s28 = sshll.u32 [#allocation5], 4
      %s29 = int_to_ptr.vmem [resolvable:$true] %s28
      %34 = dma.hbm_to_vmem [thread:$0]  %s1, 2048, %s29, [#allocation6], 128, 128, 8
    $region9: #{tpu_custom_call.1} parent=1 // pred_fallthru
      _
    // Predicated region
    $region10: #{tpu_custom_call.1} parent=1 // pred_check
      _
    $region11: #{tpu_custom_call.1} parent=1 // pred_check_branch
      %36 = sbr.rel (0) target = $region13
    $region12: #{tpu_custom_call.1} parent=1 // pred_region
      _
    $region13: #{tpu_custom_call.1} parent=1 // pred_fallthru
      _
    // Predicated region
    $region14: #{tpu_custom_call.1} parent=1 // pred_check
      _
    $region15: #{tpu_custom_call.1} parent=1 // pred_check_branch
      %38 = sbr.rel (0) target = $region17
    $region16: #{tpu_custom_call.1} parent=1 // pred_region
      %39 = dma.done [#allocation3], 4096
    $region17: #{tpu_custom_call.1} parent=1 // pred_fallthru
      _
    // Predicated region
    $region18: #{tpu_custom_call.1} parent=1 // pred_check
      _
    $region19: #{tpu_custom_call.1} parent=1 // pred_check_branch
      %41 = sbr.rel (0) target = $region21
    $region20: #{tpu_custom_call.1} parent=1 // pred_region
      %42 = dma.done [#allocation6], 2048
    $region21: #{tpu_custom_call.1} parent=1 // pred_fallthru
      _
    %v43 = vld [vmem:[#allocation2] sm:$0xff]
    %v44 = vld [vmem:[#allocation2 + $0x8] sm:$0xff]
    %v45 = vld [vmem:[#allocation2 + $0x10] sm:$0xff]
    %v46 = vld [vmem:[#allocation2 + $0x18] sm:$0xff]
    %v47 = vld [vmem:[#allocation2 + $0x20] sm:$0xff]
    %v48 = vld [vmem:[#allocation2 + $0x28] sm:$0xff]
    %v49 = vld [vmem:[#allocation2 + $0x30] sm:$0xff]
    %v50 = vld [vmem:[#allocation2 + $0x38] sm:$0xff]
    %v51 = vld [vmem:[#allocation2 + $0x40] sm:$0xff]
    %v52 = vld [vmem:[#allocation2 + $0x48] sm:$0xff]
    %v53 = vld [vmem:[#allocation2 + $0x50] sm:$0xff]
    %v54 = vld [vmem:[#allocation2 + $0x58] sm:$0xff]
    %v55 = vld [vmem:[#allocation2 + $0x60] sm:$0xff]
    %v56 = vld [vmem:[#allocation2 + $0x68] sm:$0xff]
    %v57 = vld [vmem:[#allocation2 + $0x70] sm:$0xff]
    %v58 = vld [vmem:[#allocation2 + $0x78] sm:$0xff]
    %v59 = vld [vmem:[#allocation2 + $0x80] sm:$0xff]
    %v60 = vld [vmem:[#allocation2 + $0x88] sm:$0xff]
    %v61 = vld [vmem:[#allocation2 + $0x90] sm:$0xff]
    %v62 = vld [vmem:[#allocation2 + $0x98] sm:$0xff]
    %v63 = vld [vmem:[#allocation2 + $0xa0] sm:$0xff]
    %v64 = vld [vmem:[#allocation2 + $0xa8] sm:$0xff]
    %v65 = vld [vmem:[#allocation2 + $0xb0] sm:$0xff]
    %v66 = vld [vmem:[#allocation2 + $0xb8] sm:$0xff]
    %v67 = vld [vmem:[#allocation2 + $0xc0] sm:$0xff]
    %v68 = vld [vmem:[#allocation2 + $0xc8] sm:$0xff]
    %v69 = vld [vmem:[#allocation2 + $0xd0] sm:$0xff]
    %v70 = vld [vmem:[#allocation2 + $0xd8] sm:$0xff]
    %v71 = vld [vmem:[#allocation2 + $0xe0] sm:$0xff]
    %v72 = vld [vmem:[#allocation2 + $0xe8] sm:$0xff]
    %v73 = vld [vmem:[#allocation2 + $0xf0] sm:$0xff]
    %v74 = vld [vmem:[#allocation2 + $0xf8] sm:$0xff]
    %v75 = vld [vmem:[#allocation5] sm:$0xff]
    %v76 = vld [vmem:[#allocation5 + $0x8] sm:$0xff]
    %v77 = vld [vmem:[#allocation5 + $0x10] sm:$0xff]
    %v78 = vld [vmem:[#allocation5 + $0x18] sm:$0xff]
    %v79 = vld [vmem:[#allocation5 + $0x20] sm:$0xff]
    %v80 = vld [vmem:[#allocation5 + $0x28] sm:$0xff]
    %v81 = vld [vmem:[#allocation5 + $0x30] sm:$0xff]
    %v82 = vld [vmem:[#allocation5 + $0x38] sm:$0xff]
    %v83 = vld [vmem:[#allocation5 + $0x40] sm:$0xff]
    %v84 = vld [vmem:[#allocation5 + $0x48] sm:$0xff]
    %v85 = vld [vmem:[#allocation5 + $0x50] sm:$0xff]
    %v86 = vld [vmem:[#allocation5 + $0x58] sm:$0xff]
    %v87 = vld [vmem:[#allocation5 + $0x60] sm:$0xff]
    %v88 = vld [vmem:[#allocation5 + $0x68] sm:$0xff]
    %v89 = vld [vmem:[#allocation5 + $0x70] sm:$0xff]
    %v90 = vld [vmem:[#allocation5 + $0x78] sm:$0xff]
    %v91 = vld [vmem:[%s2] sm:$0x1]
    %v93 = vlaneseq
    %v94 = vshrl.u32 %v93, 7
    %v95 = vsub.s32 0, %v94
    %v96 = vrot.slane %v91, %v95
    %98 = vmatprep.subr.mxu0 0.0
    %99 = vmatpush1.msra.mxu0 %v75
    %100 = vmatprep.subr.mxu0 0.0
    %101 = vmatpush1.msra.mxu0 %v76
    %102 = vmatprep.subr.mxu0 0.0
    %103 = vmatpush1.msra.mxu0 %v77
    %104 = vmatprep.subr.mxu0 0.0
    %105 = vmatpush1.msra.mxu0 %v78
    %106 = vmatprep.subr.mxu0 0.0
    %107 = vmatpush1.msra.mxu0 %v79
    %108 = vmatprep.subr.mxu0 0.0
    %109 = vmatpush1.msra.mxu0 %v80
    %110 = vmatprep.subr.mxu0 0.0
    %111 = vmatpush1.msra.mxu0 %v81
    %112 = vmatprep.subr.mxu0 0.0
    %113 = vmatpush1.msra.mxu0 %v82
    %114 = vmatprep.subr.mxu0 0.0
    %115 = vmatpush1.msra.mxu0 %v83
    %116 = vmatprep.subr.mxu0 0.0
    %117 = vmatpush1.msra.mxu0 %v84
    %118 = vmatprep.subr.mxu0 0.0
    %119 = vmatpush1.msra.mxu0 %v85
    %120 = vmatprep.subr.mxu0 0.0
    %121 = vmatpush1.msra.mxu0 %v86
    %122 = vmatprep.subr.mxu0 0.0
    %123 = vmatpush1.msra.mxu0 %v87
    %124 = vmatprep.subr.mxu0 0.0
    %125 = vmatpush1.msra.mxu0 %v88
    %126 = vmatprep.subr.mxu0 0.0
    %127 = vmatpush1.msra.mxu0 %v89
    %128 = vmatprep.subr.mxu0 0.0
    %129 = vmatpush1.msra.mxu0 %v90
    %130 = vmatprep.subr.mxu0 0.0
    %131 = vmatpush1.msra.mxu0 0.0
    %132 = vmatprep.subr.mxu0 0.0
    %133 = vmatpush1.msra.mxu0 0.0
    %134 = vmatprep.subr.mxu0 0.0
    %135 = vmatpush1.msra.mxu0 0.0
    %136 = vmatprep.subr.mxu0 0.0
    %137 = vmatpush1.msra.mxu0 0.0
    %138 = vmatprep.subr.mxu0 0.0
    %139 = vmatpush1.msra.mxu0 0.0
    %140 = vmatprep.subr.mxu0 0.0
    %141 = vmatpush1.msra.mxu0 0.0
    %142 = vmatprep.subr.mxu0 0.0
    %143 = vmatpush1.msra.mxu0 0.0
    %144 = vmatprep.subr.mxu0 0.0
    %145 = vmatpush1.msra.mxu0 0.0
    %146 = vmatprep.subr.mxu0 0.0
    %147 = vmatpush1.msra.mxu0 0.0
    %148 = vmatprep.subr.mxu0 0.0
    %149 = vmatpush1.msra.mxu0 0.0
    %150 = vmatprep.subr.mxu0 0.0
    %151 = vmatpush1.msra.mxu0 0.0
    %152 = vmatprep.subr.mxu0 0.0
    %153 = vmatpush1.msra.mxu0 0.0
    %154 = vmatprep.subr.mxu0 0.0
    %155 = vmatpush1.msra.mxu0 0.0
    %156 = vmatprep.subr.mxu0 0.0
    %157 = vmatpush1.msra.mxu0 0.0
    %158 = vmatprep.subr.mxu0 0.0
    %159 = vmatpush1.msra.mxu0 0.0
    %160 = vmatprep.subr.mxu0 0.0
    %161 = vmatpush1.msra.mxu0 0.0
    %162 = vmatprep.mubr.f32.mxu0 0.0
    %163 = vmatmul.mubr.f32.gmra.mrb[0].mxu0 %v43
    %v164 = vpop.f32.mrb[0].mxu0
    %v165 = vadd.f32 %v96, %v164
    %v166 = vpop.f32.mrb[0].mxu0
    %167 = vmatprep.mubr.f32.mxu0 0.0
    %168 = vmatmul.mubr.f32.gmra.mrb[0].mxu0 %v44
    %v169 = vpop.f32.mrb[0].mxu0
    %v170 = vadd.f32 %v96, %v169
    %v171 = vpop.f32.mrb[0].mxu0
    %172 = vmatprep.mubr.f32.mxu0 0.0
    %173 = vmatmul.mubr.f32.gmra.mrb[0].mxu0 %v45
    %v174 = vpop.f32.mrb[0].mxu0
    %v175 = vadd.f32 %v96, %v174
    %v176 = vpop.f32.mrb[0].mxu0
    %177 = vmatprep.mubr.f32.mxu0 0.0
    %178 = vmatmul.mubr.f32.gmra.mrb[0].mxu0 %v46
    %v179 = vpop.f32.mrb[0].mxu0
    %v180 = vadd.f32 %v96, %v179
    %v181 = vpop.f32.mrb[0].mxu0
    %182 = vmatprep.mubr.f32.mxu0 0.0
    %183 = vmatmul.mubr.f32.gmra.mrb[0].mxu0 %v47
    %v184 = vpop.f32.mrb[0].mxu0
    %v185 = vadd.f32 %v96, %v184
    %v186 = vpop.f32.mrb[0].mxu0
    %187 = vmatprep.mubr.f32.mxu0 0.0
    %188 = vmatmul.mubr.f32.gmra.mrb[0].mxu0 %v48
    %v189 = vpop.f32.mrb[0].mxu0
    %v190 = vadd.f32 %v96, %v189
    %v191 = vpop.f32.mrb[0].mxu0
    %192 = vmatprep.mubr.f32.mxu0 0.0
    %193 = vmatmul.mubr.f32.gmra.mrb[0].mxu0 %v49
    %v194 = vpop.f32.mrb[0].mxu0
    %v195 = vadd.f32 %v96, %v194
    %v196 = vpop.f32.mrb[0].mxu0
    %197 = vmatprep.mubr.f32.mxu0 0.0
    %198 = vmatmul.mubr.f32.gmra.mrb[0].mxu0 %v50
    %v199 = vpop.f32.mrb[0].mxu0
    %v200 = vadd.f32 %v96, %v199
    %v201 = vpop.f32.mrb[0].mxu0
    %202 = vmatprep.mubr.f32.mxu0 0.0
    %203 = vmatmul.mubr.f32.gmra.mrb[0].mxu0 %v51
    %v204 = vpop.f32.mrb[0].mxu0
    %v205 = vadd.f32 %v96, %v204
    %v206 = vpop.f32.mrb[0].mxu0
    %207 = vmatprep.mubr.f32.mxu0 0.0
    %208 = vmatmul.mubr.f32.gmra.mrb[0].mxu0 %v52
    %v209 = vpop.f32.mrb[0].mxu0
    %v210 = vadd.f32 %v96, %v209
    %v211 = vpop.f32.mrb[0].mxu0
    %212 = vmatprep.mubr.f32.mxu0 0.0
    %213 = vmatmul.mubr.f32.gmra.mrb[0].mxu0 %v53
    %v214 = vpop.f32.mrb[0].mxu0
    %v215 = vadd.f32 %v96, %v214
    %v216 = vpop.f32.mrb[0].mxu0
    %217 = vmatprep.mubr.f32.mxu0 0.0
    %218 = vmatmul.mubr.f32.gmra.mrb[0].mxu0 %v54
    %v219 = vpop.f32.mrb[0].mxu0
    %v220 = vadd.f32 %v96, %v219
    %v221 = vpop.f32.mrb[0].mxu0
    %222 = vmatprep.mubr.f32.mxu0 0.0
    %223 = vmatmul.mubr.f32.gmra.mrb[0].mxu0 %v55
    %v224 = vpop.f32.mrb[0].mxu0
    %v225 = vadd.f32 %v96, %v224
    %v226 = vpop.f32.mrb[0].mxu0
    %227 = vmatprep.mubr.f32.mxu0 0.0
    %228 = vmatmul.mubr.f32.gmra.mrb[0].mxu0 %v56
    %v229 = vpop.f32.mrb[0].mxu0
    %v230 = vadd.f32 %v96, %v229
    %v231 = vpop.f32.mrb[0].mxu0
    %232 = vmatprep.mubr.f32.mxu0 0.0
    %233 = vmatmul.mubr.f32.gmra.mrb[0].mxu0 %v57
    %v234 = vpop.f32.mrb[0].mxu0
    %v235 = vadd.f32 %v96, %v234
    %v236 = vpop.f32.mrb[0].mxu0
    %237 = vmatprep.mubr.f32.mxu0 0.0
    %238 = vmatmul.mubr.f32.gmra.mrb[0].mxu0 %v58
    %v239 = vpop.f32.mrb[0].mxu0
    %v240 = vadd.f32 %v96, %v239
    %v241 = vpop.f32.mrb[0].mxu0
    %242 = vmatprep.mubr.f32.mxu0 0.0
    %243 = vmatmul.mubr.f32.gmra.mrb[0].mxu0 %v59
    %v244 = vpop.f32.mrb[0].mxu0
    %v245 = vadd.f32 %v96, %v244
    %v246 = vpop.f32.mrb[0].mxu0
    %247 = vmatprep.mubr.f32.mxu0 0.0
    %248 = vmatmul.mubr.f32.gmra.mrb[0].mxu0 %v60
    %v249 = vpop.f32.mrb[0].mxu0
    %v250 = vadd.f32 %v96, %v249
    %v251 = vpop.f32.mrb[0].mxu0
    %252 = vmatprep.mubr.f32.mxu0 0.0
    %253 = vmatmul.mubr.f32.gmra.mrb[0].mxu0 %v61
    %v254 = vpop.f32.mrb[0].mxu0
    %v255 = vadd.f32 %v96, %v254
    %v256 = vpop.f32.mrb[0].mxu0
    %257 = vmatprep.mubr.f32.mxu0 0.0
    %258 = vmatmul.mubr.f32.gmra.mrb[0].mxu0 %v62
    %v259 = vpop.f32.mrb[0].mxu0
    %v260 = vadd.f32 %v96, %v259
    %v261 = vpop.f32.mrb[0].mxu0
    %262 = vmatprep.mubr.f32.mxu0 0.0
    %263 = vmatmul.mubr.f32.gmra.mrb[0].mxu0 %v63
    %v264 = vpop.f32.mrb[0].mxu0
    %v265 = vadd.f32 %v96, %v264
    %v266 = vpop.f32.mrb[0].mxu0
    %267 = vmatprep.mubr.f32.mxu0 0.0
    %268 = vmatmul.mubr.f32.gmra.mrb[0].mxu0 %v64
    %v269 = vpop.f32.mrb[0].mxu0
    %v270 = vadd.f32 %v96, %v269
    %v271 = vpop.f32.mrb[0].mxu0
    %272 = vmatprep.mubr.f32.mxu0 0.0
    %273 = vmatmul.mubr.f32.gmra.mrb[0].mxu0 %v65
    %v274 = vpop.f32.mrb[0].mxu0
    %v275 = vadd.f32 %v96, %v274
    %v276 = vpop.f32.mrb[0].mxu0
    %277 = vmatprep.mubr.f32.mxu0 0.0
    %278 = vmatmul.mubr.f32.gmra.mrb[0].mxu0 %v66
    %v279 = vpop.f32.mrb[0].mxu0
    %v280 = vadd.f32 %v96, %v279
    %v281 = vpop.f32.mrb[0].mxu0
    %282 = vmatprep.mubr.f32.mxu0 0.0
    %283 = vmatmul.mubr.f32.gmra.mrb[0].mxu0 %v67
    %v284 = vpop.f32.mrb[0].mxu0
    %v285 = vadd.f32 %v96, %v284
    %v286 = vpop.f32.mrb[0].mxu0
    %287 = vmatprep.mubr.f32.mxu0 0.0
    %288 = vmatmul.mubr.f32.gmra.mrb[0].mxu0 %v68
    %v289 = vpop.f32.mrb[0].mxu0
    %v290 = vadd.f32 %v96, %v289
    %v291 = vpop.f32.mrb[0].mxu0
    %292 = vmatprep.mubr.f32.mxu0 0.0
    %293 = vmatmul.mubr.f32.gmra.mrb[0].mxu0 %v69
    %v294 = vpop.f32.mrb[0].mxu0
    %v295 = vadd.f32 %v96, %v294
    %v296 = vpop.f32.mrb[0].mxu0
    %297 = vmatprep.mubr.f32.mxu0 0.0
    %298 = vmatmul.mubr.f32.gmra.mrb[0].mxu0 %v70
    %v299 = vpop.f32.mrb[0].mxu0
    %v300 = vadd.f32 %v96, %v299
    %v301 = vpop.f32.mrb[0].mxu0
    %302 = vmatprep.mubr.f32.mxu0 0.0
    %303 = vmatmul.mubr.f32.gmra.mrb[0].mxu0 %v71
    %v304 = vpop.f32.mrb[0].mxu0
    %v305 = vadd.f32 %v96, %v304
    %v306 = vpop.f32.mrb[0].mxu0
    %307 = vmatprep.mubr.f32.mxu0 0.0
    %308 = vmatmul.mubr.f32.gmra.mrb[0].mxu0 %v72
    %v309 = vpop.f32.mrb[0].mxu0
    %v310 = vadd.f32 %v96, %v309
    %v311 = vpop.f32.mrb[0].mxu0
    %312 = vmatprep.mubr.f32.mxu0 0.0
    %313 = vmatmul.mubr.f32.gmra.mrb[0].mxu0 %v73
    %v314 = vpop.f32.mrb[0].mxu0
    %v315 = vadd.f32 %v96, %v314
    %v316 = vpop.f32.mrb[0].mxu0
    %317 = vmatprep.mubr.f32.mxu0 0.0
    %318 = vmatmul.mubr.f32.gmra.mrb[0].mxu0 %v74
    %v319 = vpop.f32.mrb[0].mxu0
    %v320 = vadd.f32 %v96, %v319
    %v321 = vpop.f32.mrb[0].mxu0
    %322 = vdwg.mxu0
    %v323 = vmax.f32 %v165, 0.0
    %v324 = vmax.f32 %v170, 0.0
    %v325 = vmax.f32 %v175, 0.0
    %v326 = vmax.f32 %v180, 0.0
    %v327 = vmax.f32 %v185, 0.0
    %v328 = vmax.f32 %v190, 0.0
    %v329 = vmax.f32 %v195, 0.0
    %v330 = vmax.f32 %v200, 0.0
    %v331 = vmax.f32 %v205, 0.0
    %v332 = vmax.f32 %v210, 0.0
    %v333 = vmax.f32 %v215, 0.0
    %v334 = vmax.f32 %v220, 0.0
    %v335 = vmax.f32 %v225, 0.0
    %v336 = vmax.f32 %v230, 0.0
    %v337 = vmax.f32 %v235, 0.0
    %v338 = vmax.f32 %v240, 0.0
    %v339 = vmax.f32 %v245, 0.0
    %v340 = vmax.f32 %v250, 0.0
    %v341 = vmax.f32 %v255, 0.0
    %v342 = vmax.f32 %v260, 0.0
    %v343 = vmax.f32 %v265, 0.0
    %v344 = vmax.f32 %v270, 0.0
    %v345 = vmax.f32 %v275, 0.0
    %v346 = vmax.f32 %v280, 0.0
    %v347 = vmax.f32 %v285, 0.0
    %v348 = vmax.f32 %v290, 0.0
    %v349 = vmax.f32 %v295, 0.0
    %v350 = vmax.f32 %v300, 0.0
    %v351 = vmax.f32 %v305, 0.0
    %v352 = vmax.f32 %v310, 0.0
    %v353 = vmax.f32 %v315, 0.0
    %v354 = vmax.f32 %v320, 0.0
    %355 = vst [vmem:[#allocation7] sm:$0xff] %v323
    %356 = vst [vmem:[#allocation7 + $0x8] sm:$0xff] %v324
    %357 = vst [vmem:[#allocation7 + $0x10] sm:$0xff] %v325
    %358 = vst [vmem:[#allocation7 + $0x18] sm:$0xff] %v326
    %359 = vst [vmem:[#allocation7 + $0x20] sm:$0xff] %v327
    %360 = vst [vmem:[#allocation7 + $0x28] sm:$0xff] %v328
    %361 = vst [vmem:[#allocation7 + $0x30] sm:$0xff] %v329
    %362 = vst [vmem:[#allocation7 + $0x38] sm:$0xff] %v330
    %363 = vst [vmem:[#allocation7 + $0x40] sm:$0xff] %v331
    %364 = vst [vmem:[#allocation7 + $0x48] sm:$0xff] %v332
    %365 = vst [vmem:[#allocation7 + $0x50] sm:$0xff] %v333
    %366 = vst [vmem:[#allocation7 + $0x58] sm:$0xff] %v334
    %367 = vst [vmem:[#allocation7 + $0x60] sm:$0xff] %v335
    %368 = vst [vmem:[#allocation7 + $0x68] sm:$0xff] %v336
    %369 = vst [vmem:[#allocation7 + $0x70] sm:$0xff] %v337
    %370 = vst [vmem:[#allocation7 + $0x78] sm:$0xff] %v338
    %371 = vst [vmem:[#allocation7 + $0x80] sm:$0xff] %v339
    %372 = vst [vmem:[#allocation7 + $0x88] sm:$0xff] %v340
    %373 = vst [vmem:[#allocation7 + $0x90] sm:$0xff] %v341
    %374 = vst [vmem:[#allocation7 + $0x98] sm:$0xff] %v342
    %375 = vst [vmem:[#allocation7 + $0xa0] sm:$0xff] %v343
    %376 = vst [vmem:[#allocation7 + $0xa8] sm:$0xff] %v344
    %377 = vst [vmem:[#allocation7 + $0xb0] sm:$0xff] %v345
    %378 = vst [vmem:[#allocation7 + $0xb8] sm:$0xff] %v346
    %379 = vst [vmem:[#allocation7 + $0xc0] sm:$0xff] %v347
    %380 = vst [vmem:[#allocation7 + $0xc8] sm:$0xff] %v348
    %381 = vst [vmem:[#allocation7 + $0xd0] sm:$0xff] %v349
    %382 = vst [vmem:[#allocation7 + $0xd8] sm:$0xff] %v350
    %383 = vst [vmem:[#allocation7 + $0xe0] sm:$0xff] %v351
    %384 = vst [vmem:[#allocation7 + $0xe8] sm:$0xff] %v352
    %385 = vst [vmem:[#allocation7 + $0xf0] sm:$0xff] %v353
    %386 = vst [vmem:[#allocation7 + $0xf8] sm:$0xff] %v354
    // Predicated region
    $region22: #{tpu_custom_call.1} parent=1 // pred_check
      _
    $region23: #{tpu_custom_call.1} parent=1 // pred_check_branch
      %388 = sbr.rel (0) target = $region25
    $region24: #{tpu_custom_call.1} parent=1 // pred_region
      %s390 = ssub.s32 4096, 4096
      %391 = vsyncadd [#allocation4], %s390
      %s392 = sshll.u32 [#allocation7], 4
      %s393 = int_to_ptr.vmem [resolvable:$true] %s392
      %398 = dma.vmem_to_hbm [thread:$0]  %s393, 4096, %s3, [#allocation4], 128, 128, 8
    $region25: #{tpu_custom_call.1} parent=1 // pred_fallthru
      _
    // Predicated region
    $region26: #{tpu_custom_call.1} parent=1 // pred_check
      _
    $region27: #{tpu_custom_call.1} parent=1 // pred_check_branch
      %400 = sbr.rel (0) target = $region29
    $region28: #{tpu_custom_call.1} parent=1 // pred_region
      %401 = dma.done [#allocation4], 4096
    $region29: #{tpu_custom_call.1} parent=1 // pred_fallthru
      _
    %402 = vsyncpa [#allocation3], 1
    %403 = vsyncpa [#allocation6], 1
    %404 = vsyncpa [#allocation4], 1

</llo_original>
